<compile_context>
chip_gen: v6e
topology: v6e:2x2x1
jax: 0.10.0
libtpu: 0.0.40
codegen_flags: <defaults>
</compile_context>

<pallas_src>
import math
import numpy as np
import jax
import jax.numpy as jnp
from jax.experimental import pallas as pl
from jax.experimental.pallas import tpu as pltpu


# ----------------------------------------------------------------------------
# Host-side geometry / attribute precompute (mirrors the module's __init__).
# ----------------------------------------------------------------------------
def build_kernel_pos(kernel_size):
    k = kernel_size
    xx = np.arange(k) - k // 2 + (k + 1) % 2 * 0.5
    vol = np.stack(np.meshgrid(xx, xx, xx, indexing="ij"), axis=0)      # (3,k,k,k)
    pos = np.transpose(vol, (1, 2, 3, 0)).reshape(-1, 3)                # (k^3, 3)
    edge_index = np.stack(
        [np.full(k ** 3, k ** 3 // 2, dtype=np.int64),
         np.arange(k ** 3, dtype=np.int64)], axis=0)
    return pos.astype(np.float32), edge_index


def invariant_attr_r3s2_fiber_bundle(pos, vec, edge_index):
    # PONITA-style R3xS2 fiber-bundle invariants (helper not given in source).
    rel = (pos[edge_index[1]] - pos[edge_index[0]])[:, None, :]          # (E,1,3)
    ori = vec[None, :, :]                                                # (1,V,3)
    inv1 = np.sum(rel * ori, axis=-1, keepdims=True)                     # (E,V,1)
    inv2 = np.linalg.norm(rel - inv1 * ori, axis=-1, keepdims=True)      # (E,V,1)
    spatial = np.concatenate([inv1, inv2], axis=-1)                      # (E,V,2)
    spherical = vec @ vec.T                                              # (V,V)
    return spatial.astype(np.float32), spherical.astype(np.float32)


# ----------------------------------------------------------------------------
# Basis MLPs (weight generation, plain-JAX glue; tiny tables).
# ----------------------------------------------------------------------------
def polynomial_features(x, degree):
    polys = [x]
    for _ in range(1, degree):
        prev = polys[-1]
        outer = prev[..., :, None] * x[..., None, :]
        polys.append(outer.reshape(*x.shape[:-1], -1))
    return jnp.concatenate(polys, axis=-1)


def init_linear(key, fan_in, fan_out, use_bias=True):
    kw, kb = jax.random.split(key)
    bound = 1.0 / math.sqrt(fan_in)
    W = jax.random.uniform(kw, (fan_out, fan_in), jnp.float32, -bound, bound)
    b = (jax.random.uniform(kb, (fan_out,), jnp.float32, -bound, bound)
         if use_bias else None)
    return W, b


def init_params(key, in_channels, out_channels, degree=3, hidden=8, basis_dim=8):
    ks = jax.random.split(key, 6)
    basis = [init_linear(ks[0], 2 * (2 ** degree - 1), hidden),
             init_linear(ks[1], hidden, basis_dim),
             init_linear(ks[2], basis_dim, in_channels, use_bias=False)]
    fiber = [init_linear(ks[3], degree, hidden),
             init_linear(ks[4], hidden, basis_dim),
             init_linear(ks[5], basis_dim, in_channels * out_channels,
                         use_bias=False)]
    return {"basis": basis, "fiber": fiber}


def apply_mlp(x, layers, degree):
    h = polynomial_features(x, degree)
    (W1, b1), (W2, b2), (W3, _) = layers
    h = jax.nn.gelu(h @ W1.T + b1, approximate=False)   # torch.nn.GELU (exact)
    h = jax.nn.gelu(h @ W2.T + b2, approximate=False)
    return h @ W3.T


# ----------------------------------------------------------------------------
# Pallas kernel: one deep-K MXU matmul (im2col'd conv + fiber contraction) + bias.
# ----------------------------------------------------------------------------
def _matmul_bias_kernel(x_ref, w_ref, b_ref, o_ref):
    # x_ref: (TM, KK*ZC) bf16   w_ref: (KK*ZC, ZGW) bf16
    # b_ref: (1, ZGW)   f32     o_ref: (TM, ZGW)   f32
    o_ref[...] = (jnp.dot(x_ref[...], w_ref[...],
                          preferred_element_type=jnp.float32)
                  + b_ref[...])


def fiber_bundle_conv(x, spatial_w, sph_w, bias_g, kernel_size):
    """
    x:          (B, Fin, V, X, Y, Z)  float32
    spatial_w:  (k, k, k, V, Fin)     — output of `basis` MLP
    sph_w:      (Fout, Fin, V, V)     — output of `fiber_basis` MLP (g,f,v,w)
    bias_g:     (Fout,)               — per-output-channel bias
    returns:    (B, Fout, V, X, Y, Z)
    """
    B, F, V, X, Y, Z = x.shape
    C = F * V                      # conv channels (f*V + v)
    G = sph_w.shape[0]             # out_channels
    GW = G * V                     # output fibers (g*V + w)
    ZC, ZGW, XY = Z * C, Z * GW, X * Y
    k = kernel_size
    KK = k * k
    assert k % 2 == 1, "only odd kernel_size supported ('same' padding)"
    p = k // 2

    # ---- glue: channels-last, fold Z into the lane axis, pad X/Y ----
    xc = jnp.transpose(x.reshape(B, C, X, Y, Z), (0, 2, 3, 4, 1))   # (B,X,Y,Z,C)
    xf = xc.reshape(B, X, Y, ZC)                                    # (B,X,Y,Z*C)
    x_pad = jnp.pad(xf, ((0, 0), (p, p), (p, p), (0, 0)))           # (B,Xp,Yp,Z*C)

    # ---- glue: im2col over the (X, Y) taps -> lane-dense (B*X*Y, k*k*Z*C) ----
    cols = [x_pad[:, di:di + X, dj:dj + Y, :]
            for di in range(k) for dj in range(k)]                  # each (B,X,Y,ZC)
    x_cols = jnp.stack(cols, axis=3).reshape(B * XY, KK * ZC)

    # ---- glue: fold the Z-taps of the depthwise conv and the fiber
    #      contraction into one (k*k*Z*C, Z*GW) matrix ----
    # W_sp_flat[di,dj,dl, f*V+v] = spatial_w[di,dj,dl,v,f]  (PyTorch channel order)
    W_sp_flat = jnp.transpose(spatial_w, (0, 1, 2, 4, 3)).reshape(k, k, k, C)
    # Mfib[f*V+v, g*V+w] = sph_w[g,f,v,w]
    Mfib = jnp.transpose(sph_w, (1, 2, 0, 3)).reshape(C, GW)
    # Wtap[di,dj,dl,c,gw] = W_sp_flat[di,dj,dl,c] * Mfib[c,gw]
    Wtap = W_sp_flat[..., None] * Mfib[None, None, None, :, :]      # (k,k,k,C,GW)
    # Sel[dl, zi, zo] = 1 iff zi == zo + dl - p  (encodes 'same' Z-padding zeros)
    sel = np.zeros((k, Z, Z), np.float32)
    for dl in range(k):
        for zo in range(Z):
            zi = zo + dl - p
            if 0 <= zi < Z:
                sel[dl, zi, zo] = 1.0
    # Wbig[di,dj, zi,c, zo,gw] = sum_dl Sel[dl,zi,zo] * Wtap[di,dj,dl,c,gw]
    Wbig = jnp.einsum("abdcg,dzo->abzcog", Wtap, jnp.asarray(sel))
    W_all = Wbig.reshape(KK * ZC, ZGW)

    # per-output-channel bias replicated into the (z, g, v)-major column order
    bias_row = jnp.tile(jnp.repeat(bias_g.astype(jnp.float32), V), Z).reshape(1, ZGW)

    # bf16 operands (MXU-native on v5e/v6e/v7x); f32 accumulation in-kernel.
    x_cols = x_cols.astype(jnp.bfloat16)
    W_all = W_all.astype(jnp.bfloat16)

    # ---- row tiling: B folded into M; >= 2 'parallel' steps for v7x megacore ----
    M_total = B * XY
    if M_total % 256 == 0:
        TM = 128                     # full MXU row count per step, >= 2 steps
    elif M_total % 16 == 0:
        TM = M_total // 2            # 2 parallel steps (both v7x TCs busy)
    else:
        TM = M_total                 # tiny fallback: single step
    assert M_total % TM == 0
    num_m = M_total // TM

    out = pl.pallas_call(
        _matmul_bias_kernel,
        out_shape=jax.ShapeDtypeStruct((M_total, ZGW), jnp.float32),
        grid=(num_m,),
        in_specs=[
            pl.BlockSpec((TM, KK * ZC), lambda i: (i, 0)),
            # Grid-invariant operands (constant index_map): DMA'd once; the
            # duplicate pipeline buffer is ~288 KiB bf16 — negligible VMEM.
            pl.BlockSpec((KK * ZC, ZGW), lambda i: (0, 0)),
            pl.BlockSpec((1, ZGW), lambda i: (0, 0)),
        ],
        out_specs=pl.BlockSpec((TM, ZGW), lambda i: (i, 0)),
        compiler_params=pltpu.CompilerParams(
            dimension_semantics=("parallel",)),
    )(x_cols, W_all, bias_row)

    # layout glue back to the PyTorch (B, Fout, V, X, Y, Z) convention
    return jnp.transpose(out.reshape(B, X, Y, Z, G, V), (0, 4, 5, 1, 2, 3))


# ----------------------------------------------------------------------------
# Plain-JAX reference (for correctness check; mirrors the torch forward, f32).
# ----------------------------------------------------------------------------
def ref_forward(x, spatial_w, sph_w, bias_g, k):
    B, F, V, X, Y, Z = x.shape
    xc = x.reshape(B, F * V, X, Y, Z)
    w = jnp.transpose(spatial_w, (4, 3, 0, 1, 2)).reshape(F * V, 1, k, k, k)
    y = jax.lax.conv_general_dilated(
        xc, w, (1, 1, 1), "SAME",
        dimension_numbers=("NCDHW", "OIDHW", "NCDHW"),
        feature_group_count=F * V)
    y = y.reshape(B, F, V, X, Y, Z)
    out = jnp.einsum("bfvxyz,gfvw->bgwxyz", y, sph_w)
    return out + bias_g.reshape(1, -1, 1, 1, 1, 1)


# ----------------------------------------------------------------------------
if __name__ == "__main__":
    key = jax.random.PRNGKey(0)
    B, Fin, Fout, V, K, S = 2, 4, 4, 4, 3, 8
    degree = 3

    k_vec, k_x, k_p = jax.random.split(key, 3)
    vec = jax.random.normal(k_vec, (V, 3), jnp.float32)
    vec = vec / jnp.linalg.norm(vec, axis=-1, keepdims=True)
    x = jax.random.normal(k_x, (B, Fin, V, S, S, S), jnp.float32)

    params = init_params(k_p, Fin, Fout, degree=degree)

    # Precompute geometric attributes (module __init__). The module deduplicates
    # rounded attrs with np.unique and gathers; applying the MLP directly to the
    # rounded attrs is numerically identical.
    pos, edge_index = build_kernel_pos(K)
    spatial_attr, spherical_attr = invariant_attr_r3s2_fiber_bundle(
        pos, np.asarray(vec), edge_index)
    spatial_attr = np.round(spatial_attr, 5)       # (k^3, V, 2)
    spherical_attr = np.round(spherical_attr, 3)   # (V, V)

    # basis / fiber_basis MLPs (weight generation, glue)
    spatial_w = apply_mlp(jnp.asarray(spatial_attr), params["basis"], degree)
    spatial_w = spatial_w.reshape(K, K, K, V, Fin)                    # (k,k,k,V,Fin)
    fiber_out = apply_mlp(jnp.asarray(spherical_attr)[..., None],
                          params["fiber"], degree)                    # (V,V,Fin*Fout)
    sph_w = jnp.transpose(fiber_out.reshape(V, V, Fin, Fout), (3, 2, 0, 1))

    bias_g = jnp.full((Fout,), 0.01, jnp.float32)                     # bias.fill_(0.01)

    out = jax.block_until_ready(fiber_bundle_conv(x, spatial_w, sph_w, bias_g, K))
    ref = jax.block_until_ready(ref_forward(x, spatial_w, sph_w, bias_g, K))

    # Tolerance sized for bf16 matmul operands with f32 accumulation
    # (error budget ~2.8e-3 * output scale; give ~7x margin for the tails).
    ref_np = np.asarray(ref)
    scale = float(np.max(np.abs(ref_np)))
    np.testing.assert_allclose(np.asarray(out), ref_np,
                               atol=2e-2 * scale, rtol=2e-2)
    print("KERNEL_OK")
</pallas_src>

<mosaic_0001>
module attributes {stable_mosaic.version = 11 : i64} {
  func.func @_matmul_bias_kernel(%arg0: i32, %arg1: memref<64x1152xbf16, #tpu.memory_space<vmem>>, %arg2: memref<1152x128xbf16, #tpu.memory_space<vmem>>, %arg3: memref<1x128xf32, #tpu.memory_space<vmem>>, %arg4: memref<64x128xf32, #tpu.memory_space<vmem>>) attributes {dimension_semantics = [#tpu.dimension_semantics<parallel>], iteration_bounds = array<i64: 2>, scalar_prefetch = 0 : i64, scratch_operands = 0 : i64, tpu.core_type = #tpu.core_type<tc>, window_params = [{transform_indices = @transform_0, window_bounds = array<i64: 64, 1152>}, {pipeline_mode = #tpu.pipeline_mode<synchronous>, transform_indices = @transform_1, window_bounds = array<i64: 1152, 128>}, {pipeline_mode = #tpu.pipeline_mode<synchronous>, transform_indices = @transform_2, window_bounds = array<i64: 1, 128>}, {transform_indices = @transform_3, window_bounds = array<i64: 64, 128>}]} {
    %c0 = arith.constant 0 : index
    %c0_0 = arith.constant 0 : index
    %0 = vector.load %arg1[%c0, %c0_0] : memref<64x1152xbf16, #tpu.memory_space<vmem>>, vector<64x1152xbf16>
    %c0_1 = arith.constant 0 : index
    %c0_2 = arith.constant 0 : index
    %1 = vector.load %arg2[%c0_1, %c0_2] : memref<1152x128xbf16, #tpu.memory_space<vmem>>, vector<1152x128xbf16>
    %cst = arith.constant dense<0.000000e+00> : vector<64x128xf32>
    %2 = tpu.matmul %0, %1, %cst {dimension_numbers = #tpu.dot_dimension_numbers<[1], [0], [0], [1], [0, 0, 1, 1], [], []>} : vector<64x1152xbf16>, vector<1152x128xbf16>, vector<64x128xf32> -> vector<64x128xf32>
    %c0_3 = arith.constant 0 : index
    %c0_4 = arith.constant 0 : index
    %3 = vector.load %arg3[%c0_3, %c0_4] : memref<1x128xf32, #tpu.memory_space<vmem>>, vector<1x128xf32>
    %4 = vector.broadcast %3 : vector<1x128xf32> to vector<64x128xf32>
    %5 = arith.addf %2, %4 : vector<64x128xf32>
    %c0_5 = arith.constant 0 : index
    %c0_6 = arith.constant 0 : index
    %6 = vector.load %arg4[%c0_5, %c0_6] : memref<64x128xf32, #tpu.memory_space<vmem>>, vector<64x128xf32>
    tpu.vector_store %arg4[%c0_5, %c0_6], %5 {strides = array<i32>} : memref<64x128xf32, #tpu.memory_space<vmem>>, vector<64x128xf32>,
    return
  }
  func.func @transform_0(%arg0: i32) -> (i32, i32) {
    %c0_i32 = arith.constant 0 : i32
    %c0_i32_0 = arith.constant 0 : i32
    return %arg0, %c0_i32 : i32, i32
  }
  func.func @transform_1(%arg0: i32) -> (i32, i32) {
    %c0_i32 = arith.constant 0 : i32
    %c0_i32_0 = arith.constant 0 : i32
    %c0_i32_1 = arith.constant 0 : i32
    return %c0_i32, %c0_i32_0 : i32, i32
  }
  func.func @transform_2(%arg0: i32) -> (i32, i32) {
    %c0_i32 = arith.constant 0 : i32
    %c0_i32_0 = arith.constant 0 : i32
    %c0_i32_1 = arith.constant 0 : i32
    return %c0_i32, %c0_i32_0 : i32, i32
  }
  func.func @transform_3(%arg0: i32) -> (i32, i32) {
    %c0_i32 = arith.constant 0 : i32
    %c0_i32_0 = arith.constant 0 : i32
    return %arg0, %c0_i32 : i32, i32
  }
}

</mosaic_0001>

<llo_original>
// kernel: tpu_custom_call.1
$region0: #{tpu_custom_call.1}
  #allocation0 [shape = 'u32[]', space=smem, size = 0x4, offset = 0x4, fixed_abs, tag = 'smem constant byte address 0x4 - core index']
  #allocation1 [shape = 'u32[144,128]{1,0:T(1,128)}', space=vmem, size = 0x12000, scoped, tag = 'internal scratch']
  %s0 = inlined_call_operand.hbm [shape: bf16[128,1152], index: 0, kind: input, shape index: {}]
  %s1 = inlined_call_operand.hbm [shape: bf16[1152,128], index: 1, kind: input, shape index: {}]
  %s2 = inlined_call_operand.vmem [shape: f32[1,128], index: 2, kind: input, shape index: {}]
  %s3 = inlined_call_operand.hbm [shape: f32[128,128], index: 3, kind: output, shape index: {}]
  %s4 = sld [smem:[#allocation0]]
  $region53: #{tpu_custom_call.1} parent=0
    _
  %s6 = ssub.s32 1, %s4
  %s7 = scalar_select 0, %s6, %s4
  $region1: #{tpu_custom_call.1} parent=0
    #allocation2 [shape = 'u8[294912]{0}', space=vmem, size = 0x48000, scoped, tag = 'input window, operand 0']
    #allocation3 [shape = 's32[2]{0}', space=sflag, size = 0x8, scoped, tag = 'scoped memory for tpu_custom_call.1']
    #allocation4 [shape = 's32[2]{0}', space=sflag, size = 0x8, scoped, tag = 'scoped memory for tpu_custom_call.1']
    #allocation5 [shape = 'u8[294912]{0}', space=vmem, size = 0x48000, scoped, tag = 'input window, operand 1, single buffered']
    #allocation6 [shape = 's32[1]{0}', space=sflag, size = 0x4, scoped, tag = 'scoped memory for tpu_custom_call.1']
    #allocation7 [shape = 'u8[65536]{0}', space=vmem, size = 0x10000, scoped, tag = 'output window, operand 0']
    %8 = vsyncpa [#allocation3], 0
    %s9 = scalar_lea.sflag [#allocation3], 1
    %10 = vsyncpa %s9, 0
    %11 = vsyncpa [#allocation6], 0
    %12 = vsyncpa [#allocation4], 0
    %s13 = scalar_lea.sflag [#allocation4], 1
    %14 = vsyncpa %s13, 0
    loop: start=0, step=1, limit=4
    $region2: #{tpu_custom_call.1} parent=1 // loop_pre_header
      _
    $region3: #{tpu_custom_call.1} parent=1 // loop_header
      %s16 = sphi 0, %s20
      %p17 = scmp.ge.s32.totalorder %s16, 4
      %s26 = sphi 0, %s28
      %s29 = sphi 0, %s26
      %s30 = sphi 0, %s29
      %s46 = sphi 0, %s30
      %s50 = sphi 0, %s50
      %s52 = sphi 0, %s50
      %s53 = sphi 0, %s52
      %s67 = sphi 0, %s53
      %s71 = sphi 0, %s71
      %s73 = sphi 0, %s71
      %s74 = sphi 0, %s73
      %s88 = sphi 0, %s74
      %s94 = sphi 0, %s96
      %s97 = sphi 0, %s94
      %s98 = sphi 0, %s97
      %s114 = sphi 0, %s98
    $region4: #{tpu_custom_call.1} parent=1 // loop_header_branch
      %19 = sbr.rel (%p17) target = $region8
    $region5: #{tpu_custom_call.1} parent=1 // loop_body
      %s21 = ssub.s32 %s16, 1
      %s22 = ssub.s32 %s16, 2
      %s23 = sadd.s32 %s16, 1
      %s24 = ssub.s32 %s16, %s23
      %p25 = scmp.eq.s32.totalorder %s24, 0
      %s27 = sadd.s32 %s26, 1
      %s28 = scalar_select %p25, %s26, %s27
      %p31 = pneg %p25
      %p32 = scmp.eq.s32.totalorder %s16, 1
      %p33 = por %p31, %p32
      %p34 = scmp.ne.s32.totalorder %s26, %s29
      %p35 = scmp.eq.s32.totalorder %s16, 0
      %p36 = por %p34, %p35
      %p37 = scmp.ne.s32.totalorder %s26, %s29
      %p38 = scmp.eq.s32.totalorder %s21, 1
      %p39 = por %p37, %p38
      %p40 = scmp.ne.s32.totalorder %s29, %s30
      %p41 = scmp.eq.s32.totalorder %s21, 0
      %p42 = por %p40, %p41
      %p43 = scmp.ne.s32.totalorder %s29, %s30
      %p44 = scmp.eq.s32.totalorder %s22, 1
      %p45 = por %p43, %p44
      %p47 = scmp.ne.s32.totalorder %s30, %s46
      %p48 = scmp.eq.s32.totalorder %s22, 0
      %p49 = por %p47, %p48
      %s51 = sadd.s32 %s50, 1
      %p54 = scmp.eq.s32.totalorder %s16, 1
      %p55 = scmp.ne.s32.totalorder %s50, %s52
      %p56 = scmp.eq.s32.totalorder %s16, 0
      %p57 = por %p55, %p56
      %p58 = scmp.ne.s32.totalorder %s50, %s52
      %p59 = scmp.eq.s32.totalorder %s21, 1
      %p60 = por %p58, %p59
      %p61 = scmp.ne.s32.totalorder %s52, %s53
      %p62 = scmp.eq.s32.totalorder %s21, 0
      %p63 = por %p61, %p62
      %p64 = scmp.ne.s32.totalorder %s52, %s53
      %p65 = scmp.eq.s32.totalorder %s22, 1
      %p66 = por %p64, %p65
      %p68 = scmp.ne.s32.totalorder %s53, %s67
      %p69 = scmp.eq.s32.totalorder %s22, 0
      %p70 = por %p68, %p69
      %s72 = sadd.s32 %s71, 1
      %p75 = scmp.eq.s32.totalorder %s16, 1
      %p76 = scmp.ne.s32.totalorder %s71, %s73
      %p77 = scmp.eq.s32.totalorder %s16, 0
      %p78 = por %p76, %p77
      %p79 = scmp.ne.s32.totalorder %s71, %s73
      %p80 = scmp.eq.s32.totalorder %s21, 1
      %p81 = por %p79, %p80
      %p82 = scmp.ne.s32.totalorder %s73, %s74
      %p83 = scmp.eq.s32.totalorder %s21, 0
      %p84 = por %p82, %p83
      %p85 = scmp.ne.s32.totalorder %s73, %s74
      %p86 = scmp.eq.s32.totalorder %s22, 1
      %p87 = por %p85, %p86
      %p89 = scmp.ne.s32.totalorder %s74, %s88
      %p90 = scmp.eq.s32.totalorder %s22, 0
      %p91 = por %p89, %p90
      %s92 = ssub.s32 %s16, %s23
      %p93 = scmp.eq.s32.totalorder %s92, 0
      %s95 = sadd.s32 %s94, 1
      %s96 = scalar_select %p93, %s94, %s95
      %p99 = pneg %p93
      %p100 = scmp.eq.s32.totalorder %s16, 1
      %p101 = por %p99, %p100
      %p102 = scmp.ne.s32.totalorder %s94, %s97
      %p103 = scmp.eq.s32.totalorder %s16, 0
      %p104 = por %p102, %p103
      %p105 = scmp.ne.s32.totalorder %s94, %s97
      %p106 = scmp.eq.s32.totalorder %s21, 1
      %p107 = por %p105, %p106
      %p108 = scmp.ne.s32.totalorder %s97, %s98
      %p109 = scmp.eq.s32.totalorder %s21, 0
      %p110 = por %p108, %p109
      %p111 = scmp.ne.s32.totalorder %s97, %s98
      %p112 = scmp.eq.s32.totalorder %s22, 1
      %p113 = por %p111, %p112
      %p115 = scmp.ne.s32.totalorder %s98, %s114
      %p116 = scmp.eq.s32.totalorder %s22, 0
      %p117 = por %p115, %p116
      %p118 = scmp.le.s32.totalorder 1, %s16
      %p119 = scmp.lt.s32.totalorder %s16, 3
      %p120 = pnand %p118, %p119
      %p121 = pneg %p120
      // Predicated region
      $region9: #{tpu_custom_call.1} parent=5 // pred_check
        _
      $region10: #{tpu_custom_call.1} parent=5 // pred_check_branch
        %123 = sbr.rel (%p120) target = $region12
      $region11: #{tpu_custom_call.1} parent=5 // pred_region
        %s124 = ssub.s32 %s16, 1
        // Predicated region
        $region13: #{tpu_custom_call.1} parent=11 // pred_check
          %p125 = pneg %p63
        $region14: #{tpu_custom_call.1} parent=11 // pred_check_branch
          %127 = sbr.rel (%p125) target = $region16
        $region15: #{tpu_custom_call.1} parent=11 // pred_region
          %s129 = ssub.s32 9216, 9216
          %130 = vsyncadd [#allocation6], %s129
          %s131 = sshll.u32 [#allocation5], 4
          %s132 = int_to_ptr.vmem [resolvable:$true] %s131
          %137 = dma.hbm_to_vmem [thread:$0]  %s1, 9216, %s132, [#allocation6], 64, 64, 4
        $region16: #{tpu_custom_call.1} parent=11 // pred_fallthru
          _
        // Predicated region
        $region17: #{tpu_custom_call.1} parent=11 // pred_check
          %p138 = pneg %p84
        $region18: #{tpu_custom_call.1} parent=11 // pred_check_branch
          %140 = sbr.rel (%p138) target = $region20
        $region19: #{tpu_custom_call.1} parent=11 // pred_region
          _
        $region20: #{tpu_custom_call.1} parent=11 // pred_fallthru
          _
      $region12: #{tpu_custom_call.1} parent=5 // pred_fallthru
        _
      %p141 = scmp.lt.s32.totalorder %s16, 2
      // Predicated region
      $region21: #{tpu_custom_call.1} parent=5 // pred_check
        %p142 = pneg %p141
      $region22: #{tpu_custom_call.1} parent=5 // pred_check_branch
        %144 = sbr.rel (%p142) target = $region24
      $region23: #{tpu_custom_call.1} parent=5 // pred_region
        // Predicated region
        $region25: #{tpu_custom_call.1} parent=23 // pred_check
          %p145 = pneg %p36
        $region26: #{tpu_custom_call.1} parent=23 // pred_check_branch
          %147 = sbr.rel (%p145) target = $region28
        $region27: #{tpu_custom_call.1} parent=23 // pred_region
          %s148 = sand.u32 %s26, 1
          %s149 = scalar_lea.sflag [#allocation3], %s148
          %s150 = sand.u32 %s26, 1
          %s151 = smul.addr %s150, 288
          %s152 = scalar_lea.vmem [#allocation2], %s151
          %s153 = smul.u32 8, %s16
          %s155 = ssub.s32 4608, 4608
          %156 = vsyncadd %s149, %s155
          %s157 = smul.addr %s153, 9
          %s158 = smul.addr %s157, 64
          %s159 = scalar_lea.hbm %s0, %s158
          %s160 = sshll.u32 %s152, 4
          %s161 = int_to_ptr.vmem [resolvable:$true] %s160
          %166 = dma.hbm_to_vmem [thread:$0]  %s159, 4608, %s161, %s149, 576, 576, 36
        $region28: #{tpu_custom_call.1} parent=23 // pred_fallthru
          _
      $region24: #{tpu_custom_call.1} parent=5 // pred_fallthru
        _
      %p167 = scmp.le.s32.totalorder 1, %s16
      %p168 = scmp.lt.s32.totalorder %s16, 3
      %p169 = pnand %p167, %p168
      %p170 = pneg %p169
      // Predicated region
      $region29: #{tpu_custom_call.1} parent=5 // pred_check
        _
      $region30: #{tpu_custom_call.1} parent=5 // pred_check_branch
        %172 = sbr.rel (%p169) target = $region32
      $region31: #{tpu_custom_call.1} parent=5 // pred_region
        %s173 = ssub.s32 %s16, 1
        %s174 = sand.u32 %s29, 1
        %s175 = scalar_lea.sflag [#allocation3], %s174
        %s176 = sand.u32 %s29, 1
        %s177 = smul.addr %s176, 288
        %s178 = scalar_lea.vmem [#allocation2], %s177
        // Predicated region
        $region33: #{tpu_custom_call.1} parent=31 // pred_check
          %p179 = pneg %p42
        $region34: #{tpu_custom_call.1} parent=31 // pred_check_branch
          %181 = sbr.rel (%p179) target = $region36
        $region35: #{tpu_custom_call.1} parent=31 // pred_region
          %182 = dma.done %s175, 4608
        $region36: #{tpu_custom_call.1} parent=31 // pred_fallthru
          _
        // Predicated region
        $region37: #{tpu_custom_call.1} parent=31 // pred_check
          %p183 = pneg %p63
        $region38: #{tpu_custom_call.1} parent=31 // pred_check_branch
          %185 = sbr.rel (%p183) target = $region40
        $region39: #{tpu_custom_call.1} parent=31 // pred_region
          %186 = dma.done [#allocation6], 9216
        $region40: #{tpu_custom_call.1} parent=31 // pred_fallthru
          _
        %s187 = sand.u32 %s29, 1
        %s188 = scalar_lea.sflag [#allocation3], %s187
        %s189 = sand.u32 %s29, 1
        %s190 = smul.addr %s189, 288
        %s191 = scalar_lea.vmem [#allocation2], %s190
        %p192 = pneg %p42
        %p193 = pneg %p39
        %p194 = pneg %p63
        %p195 = pneg %p60
        %p196 = pneg %p84
        %p197 = pneg %p81
        %p198 = pneg %p110
        %p199 = pneg %p107
        %s200 = sand.u32 %s97, 1
        %s201 = scalar_lea.sflag [#allocation4], %s200
        %s202 = sand.u32 %s97, 1
        %s203 = smul.addr %s202, 64
        %s204 = scalar_lea.vmem [#allocation7], %s203
        %s205 = smul.u32 8, %s21
        %s206 = smul.u32 8, %s21
        %v208 = vld [vmem:[%s178] sm:$0xff]
        %v209 = vld [vmem:[%s178 + $0x8] sm:$0xff]
        %v210 = vld [vmem:[%s178 + $0x10] sm:$0xff]
        %v211 = vld [vmem:[%s178 + $0x18] sm:$0xff]
        %v212 = vld [vmem:[%s178 + $0x20] sm:$0xf]
        %v213 = vld [vmem:[%s178 + $0x24] sm:$0xff]
        %v214 = vld [vmem:[%s178 + $0x2c] sm:$0xff]
        %v215 = vld [vmem:[%s178 + $0x34] sm:$0xff]
        %v216 = vld [vmem:[%s178 + $0x3c] sm:$0xff]
        %v217 = vld [vmem:[%s178 + $0x44] sm:$0xf]
        %v218 = vld [vmem:[%s178 + $0x48] sm:$0xff]
        %v219 = vld [vmem:[%s178 + $0x50] sm:$0xff]
        %v220 = vld [vmem:[%s178 + $0x58] sm:$0xff]
        %v221 = vld [vmem:[%s178 + $0x60] sm:$0xff]
        %v222 = vld [vmem:[%s178 + $0x68] sm:$0xf]
        %v223 = vld [vmem:[%s178 + $0x6c] sm:$0xff]
        %v224 = vld [vmem:[%s178 + $0x74] sm:$0xff]
        %v225 = vld [vmem:[%s178 + $0x7c] sm:$0xff]
        %v226 = vld [vmem:[%s178 + $0x84] sm:$0xff]
        %v227 = vld [vmem:[%s178 + $0x8c] sm:$0xf]
        %v228 = vld [vmem:[%s178 + $0x90] sm:$0xff]
        %v229 = vld [vmem:[%s178 + $0x98] sm:$0xff]
        %v230 = vld [vmem:[%s178 + $0xa0] sm:$0xff]
        %v231 = vld [vmem:[%s178 + $0xa8] sm:$0xff]
        %v232 = vld [vmem:[%s178 + $0xb0] sm:$0xf]
        %v233 = vld [vmem:[%s178 + $0xb4] sm:$0xff]
        %v234 = vld [vmem:[%s178 + $0xbc] sm:$0xff]
        %v235 = vld [vmem:[%s178 + $0xc4] sm:$0xff]
        %v236 = vld [vmem:[%s178 + $0xcc] sm:$0xff]
        %v237 = vld [vmem:[%s178 + $0xd4] sm:$0xf]
        %v238 = vld [vmem:[%s178 + $0xd8] sm:$0xff]
        %v239 = vld [vmem:[%s178 + $0xe0] sm:$0xff]
        %v240 = vld [vmem:[%s178 + $0xe8] sm:$0xff]
        %v241 = vld [vmem:[%s178 + $0xf0] sm:$0xff]
        %v242 = vld [vmem:[%s178 + $0xf8] sm:$0xf]
        %v243 = vld [vmem:[%s178 + $0xfc] sm:$0xff]
        %v244 = vld [vmem:[%s178 + $0x104] sm:$0xff]
        %v245 = vld [vmem:[%s178 + $0x10c] sm:$0xff]
        %v246 = vld [vmem:[%s178 + $0x114] sm:$0xff]
        %v247 = vld [vmem:[%s178 + $0x11c] sm:$0xf]
        %v248 = vld [vmem:[#allocation5] sm:$0xf]
        %v249 = vld [vmem:[#allocation5 + $0x4] sm:$0xf]
        %v250 = vld [vmem:[#allocation5 + $0x8] sm:$0xf]
        %v251 = vld [vmem:[#allocation5 + $0xc] sm:$0xf]
        %v252 = vld [vmem:[#allocation5 + $0x10] sm:$0xf]
        %v253 = vld [vmem:[#allocation5 + $0x14] sm:$0xf]
        %v254 = vld [vmem:[#allocation5 + $0x18] sm:$0xf]
        %v255 = vld [vmem:[#allocation5 + $0x1c] sm:$0xf]
        %v256 = vld [vmem:[#allocation5 + $0x20] sm:$0xf]
        %v257 = vld [vmem:[#allocation5 + $0x24] sm:$0xf]
        %v258 = vld [vmem:[#allocation5 + $0x28] sm:$0xf]
        %v259 = vld [vmem:[#allocation5 + $0x2c] sm:$0xf]
        %v260 = vld [vmem:[#allocation5 + $0x30] sm:$0xf]
        %v261 = vld [vmem:[#allocation5 + $0x34] sm:$0xf]
        %v262 = vld [vmem:[#allocation5 + $0x38] sm:$0xf]
        %v263 = vld [vmem:[#allocation5 + $0x3c] sm:$0xf]
        %v264 = vld [vmem:[#allocation5 + $0x40] sm:$0xf]
        %v265 = vld [vmem:[#allocation5 + $0x44] sm:$0xf]
        %v266 = vld [vmem:[#allocation5 + $0x48] sm:$0xf]
        %v267 = vld [vmem:[#allocation5 + $0x4c] sm:$0xf]
        %v268 = vld [vmem:[#allocation5 + $0x50] sm:$0xf]
        %v269 = vld [vmem:[#allocation5 + $0x54] sm:$0xf]
        %v270 = vld [vmem:[#allocation5 + $0x58] sm:$0xf]
        %v271 = vld [vmem:[#allocation5 + $0x5c] sm:$0xf]
        %v272 = vld [vmem:[#allocation5 + $0x60] sm:$0xf]
        %v273 = vld [vmem:[#allocation5 + $0x64] sm:$0xf]
        %v274 = vld [vmem:[#allocation5 + $0x68] sm:$0xf]
        %v275 = vld [vmem:[#allocation5 + $0x6c] sm:$0xf]
        %v276 = vld [vmem:[#allocation5 + $0x70] sm:$0xf]
        %v277 = vld [vmem:[#allocation5 + $0x74] sm:$0xf]
        %v278 = vld [vmem:[#allocation5 + $0x78] sm:$0xf]
        %v279 = vld [vmem:[#allocation5 + $0x7c] sm:$0xf]
        %v280 = vld [vmem:[#allocation5 + $0x80] sm:$0xf]
        %v281 = vld [vmem:[#allocation5 + $0x84] sm:$0xf]
        %v282 = vld [vmem:[#allocation5 + $0x88] sm:$0xf]
        %v283 = vld [vmem:[#allocation5 + $0x8c] sm:$0xf]
        %v284 = vld [vmem:[#allocation5 + $0x90] sm:$0xf]
        %v285 = vld [vmem:[#allocation5 + $0x94] sm:$0xf]
        %v286 = vld [vmem:[#allocation5 + $0x98] sm:$0xf]
        %v287 = vld [vmem:[#allocation5 + $0x9c] sm:$0xf]
        %v288 = vld [vmem:[#allocation5 + $0xa0] sm:$0xf]
        %v289 = vld [vmem:[#allocation5 + $0xa4] sm:$0xf]
        %v290 = vld [vmem:[#allocation5 + $0xa8] sm:$0xf]
        %v291 = vld [vmem:[#allocation5 + $0xac] sm:$0xf]
        %v292 = vld [vmem:[#allocation5 + $0xb0] sm:$0xf]
        %v293 = vld [vmem:[#allocation5 + $0xb4] sm:$0xf]
        %v294 = vld [vmem:[#allocation5 + $0xb8] sm:$0xf]
        %v295 = vld [vmem:[#allocation5 + $0xbc] sm:$0xf]
        %v296 = vld [vmem:[#allocation5 + $0xc0] sm:$0xf]
        %v297 = vld [vmem:[#allocation5 + $0xc4] sm:$0xf]
        %v298 = vld [vmem:[#allocation5 + $0xc8] sm:$0xf]
        %v299 = vld [vmem:[#allocation5 + $0xcc] sm:$0xf]
        %v300 = vld [vmem:[#allocation5 + $0xd0] sm:$0xf]
        %v301 = vld [vmem:[#allocation5 + $0xd4] sm:$0xf]
        %v302 = vld [vmem:[#allocation5 + $0xd8] sm:$0xf]
        %v303 = vld [vmem:[#allocation5 + $0xdc] sm:$0xf]
        %v304 = vld [vmem:[#allocation5 + $0xe0] sm:$0xf]
        %v305 = vld [vmem:[#allocation5 + $0xe4] sm:$0xf]
        %v306 = vld [vmem:[#allocation5 + $0xe8] sm:$0xf]
        %v307 = vld [vmem:[#allocation5 + $0xec] sm:$0xf]
        %v308 = vld [vmem:[#allocation5 + $0xf0] sm:$0xf]
        %v309 = vld [vmem:[#allocation5 + $0xf4] sm:$0xf]
        %v310 = vld [vmem:[#allocation5 + $0xf8] sm:$0xf]
        %v311 = vld [vmem:[#allocation5 + $0xfc] sm:$0xf]
        %v312 = vld [vmem:[#allocation5 + $0x100] sm:$0xf]
        %v313 = vld [vmem:[#allocation5 + $0x104] sm:$0xf]
        %v314 = vld [vmem:[#allocation5 + $0x108] sm:$0xf]
        %v315 = vld [vmem:[#allocation5 + $0x10c] sm:$0xf]
        %v316 = vld [vmem:[#allocation5 + $0x110] sm:$0xf]
        %v317 = vld [vmem:[#allocation5 + $0x114] sm:$0xf]
        %v318 = vld [vmem:[#allocation5 + $0x118] sm:$0xf]
        %v319 = vld [vmem:[#allocation5 + $0x11c] sm:$0xf]
        %v320 = vld [vmem:[#allocation5 + $0x120] sm:$0xf]
        %v321 = vld [vmem:[#allocation5 + $0x124] sm:$0xf]
        %v322 = vld [vmem:[#allocation5 + $0x128] sm:$0xf]
        %v323 = vld [vmem:[#allocation5 + $0x12c] sm:$0xf]
        %v324 = vld [vmem:[#allocation5 + $0x130] sm:$0xf]
        %v325 = vld [vmem:[#allocation5 + $0x134] sm:$0xf]
        %v326 = vld [vmem:[#allocation5 + $0x138] sm:$0xf]
        %v327 = vld [vmem:[#allocation5 + $0x13c] sm:$0xf]
        %v328 = vld [vmem:[#allocation5 + $0x140] sm:$0xf]
        %v329 = vld [vmem:[#allocation5 + $0x144] sm:$0xf]
        %v330 = vld [vmem:[#allocation5 + $0x148] sm:$0xf]
        %v331 = vld [vmem:[#allocation5 + $0x14c] sm:$0xf]
        %v332 = vld [vmem:[#allocation5 + $0x150] sm:$0xf]
        %v333 = vld [vmem:[#allocation5 + $0x154] sm:$0xf]
        %v334 = vld [vmem:[#allocation5 + $0x158] sm:$0xf]
        %v335 = vld [vmem:[#allocation5 + $0x15c] sm:$0xf]
        %v336 = vld [vmem:[#allocation5 + $0x160] sm:$0xf]
        %v337 = vld [vmem:[#allocation5 + $0x164] sm:$0xf]
        %v338 = vld [vmem:[#allocation5 + $0x168] sm:$0xf]
        %v339 = vld [vmem:[#allocation5 + $0x16c] sm:$0xf]
        %v340 = vld [vmem:[#allocation5 + $0x170] sm:$0xf]
        %v341 = vld [vmem:[#allocation5 + $0x174] sm:$0xf]
        %v342 = vld [vmem:[#allocation5 + $0x178] sm:$0xf]
        %v343 = vld [vmem:[#allocation5 + $0x17c] sm:$0xf]
        %v344 = vld [vmem:[#allocation5 + $0x180] sm:$0xf]
        %v345 = vld [vmem:[#allocation5 + $0x184] sm:$0xf]
        %v346 = vld [vmem:[#allocation5 + $0x188] sm:$0xf]
        %v347 = vld [vmem:[#allocation5 + $0x18c] sm:$0xf]
        %v348 = vld [vmem:[#allocation5 + $0x190] sm:$0xf]
        %v349 = vld [vmem:[#allocation5 + $0x194] sm:$0xf]
        %v350 = vld [vmem:[#allocation5 + $0x198] sm:$0xf]
        %v351 = vld [vmem:[#allocation5 + $0x19c] sm:$0xf]
        %v352 = vld [vmem:[#allocation5 + $0x1a0] sm:$0xf]
        %v353 = vld [vmem:[#allocation5 + $0x1a4] sm:$0xf]
        %v354 = vld [vmem:[#allocation5 + $0x1a8] sm:$0xf]
        %v355 = vld [vmem:[#allocation5 + $0x1ac] sm:$0xf]
        %v356 = vld [vmem:[#allocation5 + $0x1b0] sm:$0xf]
        %v357 = vld [vmem:[#allocation5 + $0x1b4] sm:$0xf]
        %v358 = vld [vmem:[#allocation5 + $0x1b8] sm:$0xf]
        %v359 = vld [vmem:[#allocation5 + $0x1bc] sm:$0xf]
        %v360 = vld [vmem:[#allocation5 + $0x1c0] sm:$0xf]
        %v361 = vld [vmem:[#allocation5 + $0x1c4] sm:$0xf]
        %v362 = vld [vmem:[#allocation5 + $0x1c8] sm:$0xf]
        %v363 = vld [vmem:[#allocation5 + $0x1cc] sm:$0xf]
        %v364 = vld [vmem:[#allocation5 + $0x1d0] sm:$0xf]
        %v365 = vld [vmem:[#allocation5 + $0x1d4] sm:$0xf]
        %v366 = vld [vmem:[#allocation5 + $0x1d8] sm:$0xf]
        %v367 = vld [vmem:[#allocation5 + $0x1dc] sm:$0xf]
        %v368 = vld [vmem:[#allocation5 + $0x1e0] sm:$0xf]
        %v369 = vld [vmem:[#allocation5 + $0x1e4] sm:$0xf]
        %v370 = vld [vmem:[#allocation5 + $0x1e8] sm:$0xf]
        %v371 = vld [vmem:[#allocation5 + $0x1ec] sm:$0xf]
        %v372 = vld [vmem:[#allocation5 + $0x1f0] sm:$0xf]
        %v373 = vld [vmem:[#allocation5 + $0x1f4] sm:$0xf]
        %v374 = vld [vmem:[#allocation5 + $0x1f8] sm:$0xf]
        %v375 = vld [vmem:[#allocation5 + $0x1fc] sm:$0xf]
        %v376 = vld [vmem:[#allocation5 + $0x200] sm:$0xf]
        %v377 = vld [vmem:[#allocation5 + $0x204] sm:$0xf]
        %v378 = vld [vmem:[#allocation5 + $0x208] sm:$0xf]
        %v379 = vld [vmem:[#allocation5 + $0x20c] sm:$0xf]
        %v380 = vld [vmem:[#allocation5 + $0x210] sm:$0xf]
        %v381 = vld [vmem:[#allocation5 + $0x214] sm:$0xf]
        %v382 = vld [vmem:[#allocation5 + $0x218] sm:$0xf]
        %v383 = vld [vmem:[#allocation5 + $0x21c] sm:$0xf]
        %v384 = vld [vmem:[#allocation5 + $0x220] sm:$0xf]
        %v385 = vld [vmem:[#allocation5 + $0x224] sm:$0xf]
        %v386 = vld [vmem:[#allocation5 + $0x228] sm:$0xf]
        %v387 = vld [vmem:[#allocation5 + $0x22c] sm:$0xf]
        %v388 = vld [vmem:[#allocation5 + $0x230] sm:$0xf]
        %v389 = vld [vmem:[#allocation5 + $0x234] sm:$0xf]
        %v390 = vld [vmem:[#allocation5 + $0x238] sm:$0xf]
        %v391 = vld [vmem:[#allocation5 + $0x23c] sm:$0xf]
        %v392 = vld [vmem:[%s2] sm:$0x1]
        %v394 = vlaneseq
        %v395 = vshrl.u32 %v394, 7
        %v396 = vsub.s32 0, %v395
        %v397 = vrot.slane %v392, %v396
        %v439 = vunpack.c.l.b16 %v208
        %v440 = vunpack.c.h.b16 %v208
        %v441 = vunpack.c.l.b16 %v209
        %v442 = vunpack.c.h.b16 %v209
        %v443 = vunpack.c.l.b16 %v210
        %v444 = vunpack.c.h.b16 %v210
        %v445 = vunpack.c.l.b16 %v211
        %v446 = vunpack.c.h.b16 %v211
        %v447 = vunpack.c.l.b16 %v212
        %v448 = vunpack.c.l.b16 %v213
        %v449 = vunpack.c.h.b16 %v213
        %v450 = vunpack.c.l.b16 %v214
        %v451 = vunpack.c.h.b16 %v214
        %v452 = vunpack.c.l.b16 %v215
        %v453 = vunpack.c.h.b16 %v215
        %v454 = vunpack.c.l.b16 %v216
        %v455 = vunpack.c.h.b16 %v216
        %v456 = vunpack.c.l.b16 %v217
        %v457 = vunpack.c.l.b16 %v218
        %v458 = vunpack.c.h.b16 %v218
        %v459 = vunpack.c.l.b16 %v219
        %v460 = vunpack.c.h.b16 %v219
        %v461 = vunpack.c.l.b16 %v220
        %v462 = vunpack.c.h.b16 %v220
        %v463 = vunpack.c.l.b16 %v221
        %v464 = vunpack.c.h.b16 %v221
        %v465 = vunpack.c.l.b16 %v222
        %v466 = vunpack.c.l.b16 %v223
        %v467 = vunpack.c.h.b16 %v223
        %v468 = vunpack.c.l.b16 %v224
        %v469 = vunpack.c.h.b16 %v224
        %v470 = vunpack.c.l.b16 %v225
        %v471 = vunpack.c.h.b16 %v225
        %v472 = vunpack.c.l.b16 %v226
        %v473 = vunpack.c.h.b16 %v226
        %v474 = vunpack.c.l.b16 %v227
        %v475 = vunpack.c.l.b16 %v228
        %v476 = vunpack.c.h.b16 %v228
        %v477 = vunpack.c.l.b16 %v229
        %v478 = vunpack.c.h.b16 %v229
        %v479 = vunpack.c.l.b16 %v230
        %v480 = vunpack.c.h.b16 %v230
        %v481 = vunpack.c.l.b16 %v231
        %v482 = vunpack.c.h.b16 %v231
        %v483 = vunpack.c.l.b16 %v232
        %v484 = vunpack.c.l.b16 %v233
        %v485 = vunpack.c.h.b16 %v233
        %v486 = vunpack.c.l.b16 %v234
        %v487 = vunpack.c.h.b16 %v234
        %v488 = vunpack.c.l.b16 %v235
        %v489 = vunpack.c.h.b16 %v235
        %v490 = vunpack.c.l.b16 %v236
        %v491 = vunpack.c.h.b16 %v236
        %v492 = vunpack.c.l.b16 %v237
        %v493 = vunpack.c.l.b16 %v238
        %v494 = vunpack.c.h.b16 %v238
        %v495 = vunpack.c.l.b16 %v239
        %v496 = vunpack.c.h.b16 %v239
        %v497 = vunpack.c.l.b16 %v240
        %v498 = vunpack.c.h.b16 %v240
        %v499 = vunpack.c.l.b16 %v241
        %v500 = vunpack.c.h.b16 %v241
        %v501 = vunpack.c.l.b16 %v242
        %v502 = vunpack.c.l.b16 %v243
        %v503 = vunpack.c.h.b16 %v243
        %v504 = vunpack.c.l.b16 %v244
        %v505 = vunpack.c.h.b16 %v244
        %v506 = vunpack.c.l.b16 %v245
        %v507 = vunpack.c.h.b16 %v245
        %v508 = vunpack.c.l.b16 %v246
        %v509 = vunpack.c.h.b16 %v246
        %v510 = vunpack.c.l.b16 %v247
        %v511 = vpack.c.b16 %v448, %v439
        %v512 = vpack.c.b16 %v449, %v440
        %v513 = vpack.c.b16 %v450, %v441
        %v514 = vpack.c.b16 %v451, %v442
        %v515 = vpack.c.b16 %v452, %v443
        %v516 = vpack.c.b16 %v453, %v444
        %v517 = vpack.c.b16 %v454, %v445
        %v518 = vpack.c.b16 %v455, %v446
        %v519 = vpack.c.b16 %v456, %v447
        %v520 = vpack.c.b16 %v466, %v457
        %v521 = vpack.c.b16 %v467, %v458
        %v522 = vpack.c.b16 %v468, %v459
        %v523 = vpack.c.b16 %v469, %v460
        %v524 = vpack.c.b16 %v470, %v461
        %v525 = vpack.c.b16 %v471, %v462
        %v526 = vpack.c.b16 %v472, %v463
        %v527 = vpack.c.b16 %v473, %v464
        %v528 = vpack.c.b16 %v474, %v465
        %v529 = vpack.c.b16 %v484, %v475
        %v530 = vpack.c.b16 %v485, %v476
        %v531 = vpack.c.b16 %v486, %v477
        %v532 = vpack.c.b16 %v487, %v478
        %v533 = vpack.c.b16 %v488, %v479
        %v534 = vpack.c.b16 %v489, %v480
        %v535 = vpack.c.b16 %v490, %v481
        %v536 = vpack.c.b16 %v491, %v482
        %v537 = vpack.c.b16 %v492, %v483
        %v538 = vpack.c.b16 %v502, %v493
        %v539 = vpack.c.b16 %v503, %v494
        %v540 = vpack.c.b16 %v504, %v495
        %v541 = vpack.c.b16 %v505, %v496
        %v542 = vpack.c.b16 %v506, %v497
        %v543 = vpack.c.b16 %v507, %v498
        %v544 = vpack.c.b16 %v508, %v499
        %v545 = vpack.c.b16 %v509, %v500
        %v546 = vpack.c.b16 %v510, %v501
        %v727 = vunpack.c.l.b16 %v248
        %v728 = vunpack.c.l.b16 %v249
        %v729 = vunpack.c.l.b16 %v250
        %v730 = vunpack.c.l.b16 %v251
        %v731 = vunpack.c.l.b16 %v252
        %v732 = vunpack.c.l.b16 %v253
        %v733 = vunpack.c.l.b16 %v254
        %v734 = vunpack.c.l.b16 %v255
        %v735 = vunpack.c.l.b16 %v256
        %v736 = vunpack.c.l.b16 %v257
        %v737 = vunpack.c.l.b16 %v258
        %v738 = vunpack.c.l.b16 %v259
        %v739 = vunpack.c.l.b16 %v260
        %v740 = vunpack.c.l.b16 %v261
        %v741 = vunpack.c.l.b16 %v262
        %v742 = vunpack.c.l.b16 %v263
        %v743 = vunpack.c.l.b16 %v264
        %v744 = vunpack.c.l.b16 %v265
        %v745 = vunpack.c.l.b16 %v266
        %v746 = vunpack.c.l.b16 %v267
        %v747 = vunpack.c.l.b16 %v268
        %v748 = vunpack.c.l.b16 %v269
        %v749 = vunpack.c.l.b16 %v270
        %v750 = vunpack.c.l.b16 %v271
        %v751 = vunpack.c.l.b16 %v272
        %v752 = vunpack.c.l.b16 %v273
        %v753 = vunpack.c.l.b16 %v274
        %v754 = vunpack.c.l.b16 %v275
        %v755 = vunpack.c.l.b16 %v276
        %v756 = vunpack.c.l.b16 %v277
        %v757 = vunpack.c.l.b16 %v278
        %v758 = vunpack.c.l.b16 %v279
        %v759 = vunpack.c.l.b16 %v280
        %v760 = vunpack.c.l.b16 %v281
        %v761 = vunpack.c.l.b16 %v282
        %v762 = vunpack.c.l.b16 %v283
        %v763 = vunpack.c.l.b16 %v284
        %v764 = vunpack.c.l.b16 %v285
        %v765 = vunpack.c.l.b16 %v286
        %v766 = vunpack.c.l.b16 %v287
        %v767 = vunpack.c.l.b16 %v288
        %v768 = vunpack.c.l.b16 %v289
        %v769 = vunpack.c.l.b16 %v290
        %v770 = vunpack.c.l.b16 %v291
        %v771 = vunpack.c.l.b16 %v292
        %v772 = vunpack.c.l.b16 %v293
        %v773 = vunpack.c.l.b16 %v294
        %v774 = vunpack.c.l.b16 %v295
        %v775 = vunpack.c.l.b16 %v296
        %v776 = vunpack.c.l.b16 %v297
        %v777 = vunpack.c.l.b16 %v298
        %v778 = vunpack.c.l.b16 %v299
        %v779 = vunpack.c.l.b16 %v300
        %v780 = vunpack.c.l.b16 %v301
        %v781 = vunpack.c.l.b16 %v302
        %v782 = vunpack.c.l.b16 %v303
        %v783 = vunpack.c.l.b16 %v304
        %v784 = vunpack.c.l.b16 %v305
        %v785 = vunpack.c.l.b16 %v306
        %v786 = vunpack.c.l.b16 %v307
        %v787 = vunpack.c.l.b16 %v308
        %v788 = vunpack.c.l.b16 %v309
        %v789 = vunpack.c.l.b16 %v310
        %v790 = vunpack.c.l.b16 %v311
        %v791 = vunpack.c.l.b16 %v312
        %v792 = vunpack.c.l.b16 %v313
        %v793 = vunpack.c.l.b16 %v314
        %v794 = vunpack.c.l.b16 %v315
        %v795 = vunpack.c.l.b16 %v316
        %v796 = vunpack.c.l.b16 %v317
        %v797 = vunpack.c.l.b16 %v318
        %v798 = vunpack.c.l.b16 %v319
        %v799 = vunpack.c.l.b16 %v320
        %v800 = vunpack.c.l.b16 %v321
        %v801 = vunpack.c.l.b16 %v322
        %v802 = vunpack.c.l.b16 %v323
        %v803 = vunpack.c.l.b16 %v324
        %v804 = vunpack.c.l.b16 %v325
        %v805 = vunpack.c.l.b16 %v326
        %v806 = vunpack.c.l.b16 %v327
        %v807 = vunpack.c.l.b16 %v328
        %v808 = vunpack.c.l.b16 %v329
        %v809 = vunpack.c.l.b16 %v330
        %v810 = vunpack.c.l.b16 %v331
        %v811 = vunpack.c.l.b16 %v332
        %v812 = vunpack.c.l.b16 %v333
        %v813 = vunpack.c.l.b16 %v334
        %v814 = vunpack.c.l.b16 %v335
        %v815 = vunpack.c.l.b16 %v336
        %v816 = vunpack.c.l.b16 %v337
        %v817 = vunpack.c.l.b16 %v338
        %v818 = vunpack.c.l.b16 %v339
        %v819 = vunpack.c.l.b16 %v340
        %v820 = vunpack.c.l.b16 %v341
        %v821 = vunpack.c.l.b16 %v342
        %v822 = vunpack.c.l.b16 %v343
        %v823 = vunpack.c.l.b16 %v344
        %v824 = vunpack.c.l.b16 %v345
        %v825 = vunpack.c.l.b16 %v346
        %v826 = vunpack.c.l.b16 %v347
        %v827 = vunpack.c.l.b16 %v348
        %v828 = vunpack.c.l.b16 %v349
        %v829 = vunpack.c.l.b16 %v350
        %v830 = vunpack.c.l.b16 %v351
        %v831 = vunpack.c.l.b16 %v352
        %v832 = vunpack.c.l.b16 %v353
        %v833 = vunpack.c.l.b16 %v354
        %v834 = vunpack.c.l.b16 %v355
        %v835 = vunpack.c.l.b16 %v356
        %v836 = vunpack.c.l.b16 %v357
        %v837 = vunpack.c.l.b16 %v358
        %v838 = vunpack.c.l.b16 %v359
        %v839 = vunpack.c.l.b16 %v360
        %v840 = vunpack.c.l.b16 %v361
        %v841 = vunpack.c.l.b16 %v362
        %v842 = vunpack.c.l.b16 %v363
        %v843 = vunpack.c.l.b16 %v364
        %v844 = vunpack.c.l.b16 %v365
        %v845 = vunpack.c.l.b16 %v366
        %v846 = vunpack.c.l.b16 %v367
        %v847 = vunpack.c.l.b16 %v368
        %v848 = vunpack.c.l.b16 %v369
        %v849 = vunpack.c.l.b16 %v370
        %v850 = vunpack.c.l.b16 %v371
        %v851 = vunpack.c.l.b16 %v372
        %v852 = vunpack.c.l.b16 %v373
        %v853 = vunpack.c.l.b16 %v374
        %v854 = vunpack.c.l.b16 %v375
        %v855 = vunpack.c.l.b16 %v376
        %v856 = vunpack.c.l.b16 %v377
        %v857 = vunpack.c.l.b16 %v378
        %v858 = vunpack.c.l.b16 %v379
        %v859 = vunpack.c.l.b16 %v380
        %v860 = vunpack.c.l.b16 %v381
        %v861 = vunpack.c.l.b16 %v382
        %v862 = vunpack.c.l.b16 %v383
        %v863 = vunpack.c.l.b16 %v384
        %v864 = vunpack.c.l.b16 %v385
        %v865 = vunpack.c.l.b16 %v386
        %v866 = vunpack.c.l.b16 %v387
        %v867 = vunpack.c.l.b16 %v388
        %v868 = vunpack.c.l.b16 %v389
        %v869 = vunpack.c.l.b16 %v390
        %v870 = vunpack.c.l.b16 %v391
        %v871 = vpack.c.b16 %v728, %v727
        %v872 = vpack.c.b16 %v730, %v729
        %v873 = vpack.c.b16 %v732, %v731
        %v874 = vpack.c.b16 %v734, %v733
        %v875 = vpack.c.b16 %v736, %v735
        %v876 = vpack.c.b16 %v738, %v737
        %v877 = vpack.c.b16 %v740, %v739
        %v878 = vpack.c.b16 %v742, %v741
        %v879 = vpack.c.b16 %v744, %v743
        %v880 = vpack.c.b16 %v746, %v745
        %v881 = vpack.c.b16 %v748, %v747
        %v882 = vpack.c.b16 %v750, %v749
        %v883 = vpack.c.b16 %v752, %v751
        %v884 = vpack.c.b16 %v754, %v753
        %v885 = vpack.c.b16 %v756, %v755
        %v886 = vpack.c.b16 %v758, %v757
        %v887 = vpack.c.b16 %v760, %v759
        %v888 = vpack.c.b16 %v762, %v761
        %v889 = vpack.c.b16 %v764, %v763
        %v890 = vpack.c.b16 %v766, %v765
        %v891 = vpack.c.b16 %v768, %v767
        %v892 = vpack.c.b16 %v770, %v769
        %v893 = vpack.c.b16 %v772, %v771
        %v894 = vpack.c.b16 %v774, %v773
        %v895 = vpack.c.b16 %v776, %v775
        %v896 = vpack.c.b16 %v778, %v777
        %v897 = vpack.c.b16 %v780, %v779
        %v898 = vpack.c.b16 %v782, %v781
        %v899 = vpack.c.b16 %v784, %v783
        %v900 = vpack.c.b16 %v786, %v785
        %v901 = vpack.c.b16 %v788, %v787
        %v902 = vpack.c.b16 %v790, %v789
        %v903 = vpack.c.b16 %v792, %v791
        %v904 = vpack.c.b16 %v794, %v793
        %v905 = vpack.c.b16 %v796, %v795
        %v906 = vpack.c.b16 %v798, %v797
        %v907 = vpack.c.b16 %v800, %v799
        %v908 = vpack.c.b16 %v802, %v801
        %v909 = vpack.c.b16 %v804, %v803
        %v910 = vpack.c.b16 %v806, %v805
        %v911 = vpack.c.b16 %v808, %v807
        %v912 = vpack.c.b16 %v810, %v809
        %v913 = vpack.c.b16 %v812, %v811
        %v914 = vpack.c.b16 %v814, %v813
        %v915 = vpack.c.b16 %v816, %v815
        %v916 = vpack.c.b16 %v818, %v817
        %v917 = vpack.c.b16 %v820, %v819
        %v918 = vpack.c.b16 %v822, %v821
        %v919 = vpack.c.b16 %v824, %v823
        %v920 = vpack.c.b16 %v826, %v825
        %v921 = vpack.c.b16 %v828, %v827
        %v922 = vpack.c.b16 %v830, %v829
        %v923 = vpack.c.b16 %v832, %v831
        %v924 = vpack.c.b16 %v834, %v833
        %v925 = vpack.c.b16 %v836, %v835
        %v926 = vpack.c.b16 %v838, %v837
        %v927 = vpack.c.b16 %v840, %v839
        %v928 = vpack.c.b16 %v842, %v841
        %v929 = vpack.c.b16 %v844, %v843
        %v930 = vpack.c.b16 %v846, %v845
        %v931 = vpack.c.b16 %v848, %v847
        %v932 = vpack.c.b16 %v850, %v849
        %v933 = vpack.c.b16 %v852, %v851
        %v934 = vpack.c.b16 %v854, %v853
        %v935 = vpack.c.b16 %v856, %v855
        %v936 = vpack.c.b16 %v858, %v857
        %v937 = vpack.c.b16 %v860, %v859
        %v938 = vpack.c.b16 %v862, %v861
        %v939 = vpack.c.b16 %v864, %v863
        %v940 = vpack.c.b16 %v866, %v865
        %v941 = vpack.c.b16 %v868, %v867
        %v942 = vpack.c.b16 %v870, %v869
        %1015 = vmatprep.subr.bf16.mxu0 0
        %1016 = vmatpush1.bf16.msra.mxu0 %v878
        %1017 = vmatprep.subr.bf16.mxu0 0
        %1018 = vmatpush1.bf16.msra.mxu0 %v877
        %1019 = vmatprep.subr.bf16.mxu0 0
        %1020 = vmatpush1.bf16.msra.mxu0 %v876
        %1021 = vmatprep.subr.bf16.mxu0 0
        %1022 = vmatpush1.bf16.msra.mxu0 %v875
        %1023 = vmatprep.subr.bf16.mxu0 0
        %1024 = vmatpush1.bf16.msra.mxu0 %v874
        %1025 = vmatprep.subr.bf16.mxu0 0
        %1026 = vmatpush1.bf16.msra.mxu0 %v873
        %1027 = vmatprep.subr.bf16.mxu0 0
        %1028 = vmatpush1.bf16.msra.mxu0 %v872
        %1029 = vmatprep.subr.bf16.mxu0 0
        %1030 = vmatpush1.bf16.msra.mxu0 %v871
        %1031 = vmatprep.subr.bf16.mxu0 0
        %1032 = vmatpush2.bf16.msra.mxu0 %v886
        %1033 = vmatprep.subr.bf16.mxu0 0
        %1034 = vmatpush2.bf16.msra.mxu0 %v885
        %1035 = vmatprep.subr.bf16.mxu0 0
        %1036 = vmatpush2.bf16.msra.mxu0 %v884
        %1037 = vmatprep.subr.bf16.mxu0 0
        %1038 = vmatpush2.bf16.msra.mxu0 %v883
        %1039 = vmatprep.subr.bf16.mxu0 0
        %1040 = vmatpush2.bf16.msra.mxu0 %v882
        %1041 = vmatprep.subr.bf16.mxu0 0
        %1042 = vmatpush2.bf16.msra.mxu0 %v881
        %1043 = vmatprep.subr.bf16.mxu0 0
        %1044 = vmatpush2.bf16.msra.mxu0 %v880
        %1045 = vmatprep.subr.bf16.mxu0 0
        %1046 = vmatpush2.bf16.msra.mxu0 %v879
        %1047 = vmatprep.mubr.bf16.mxu0 %v512
        %1048 = vmatmul.mubr.bf16.gmra.mxu0 %v511
        %v1049 = vpop.f32.mrf.mxu0
        %v1050 = vadd.f32 %v397, %v1049
        %v1051 = vpop.f32.mrf.mxu0
        %v1052 = vpop.f32.mrf.mxu0
        %v1053 = vadd.f32 %v397, %v1052
        %v1054 = vpop.f32.mrf.mxu0
        %1055 = vmatprep.mubr.bf16.mxu0 %v521
        %1056 = vmatmul.mubr.bf16.gmra.mxu0 %v520
        %v1057 = vpop.f32.mrf.mxu0
        %v1058 = vadd.f32 %v397, %v1057
        %v1059 = vpop.f32.mrf.mxu0
        %v1060 = vpop.f32.mrf.mxu0
        %v1061 = vadd.f32 %v397, %v1060
        %v1062 = vpop.f32.mrf.mxu0
        %1063 = vmatprep.mubr.bf16.mxu0 %v530
        %1064 = vmatmul.mubr.bf16.gmra.mxu0 %v529
        %v1065 = vpop.f32.mrf.mxu0
        %v1066 = vadd.f32 %v397, %v1065
        %v1067 = vpop.f32.mrf.mxu0
        %v1068 = vpop.f32.mrf.mxu0
        %v1069 = vadd.f32 %v397, %v1068
        %v1070 = vpop.f32.mrf.mxu0
        %1071 = vmatprep.mubr.bf16.mxu0 %v539
        %1072 = vmatmul.mubr.bf16.gmra.mxu0 %v538
        %v1073 = vpop.f32.mrf.mxu0
        %v1074 = vadd.f32 %v397, %v1073
        %v1075 = vpop.f32.mrf.mxu0
        %v1076 = vpop.f32.mrf.mxu0
        %v1077 = vadd.f32 %v397, %v1076
        %v1078 = vpop.f32.mrf.mxu0
        %1079 = vdwg.mxu0
        %1080 = vmatprep.subr.bf16.mxu0 0
        %1081 = vmatpush1.bf16.msra.mxu0 %v894
        %1082 = vmatprep.subr.bf16.mxu0 0
        %1083 = vmatpush1.bf16.msra.mxu0 %v893
        %1084 = vmatprep.subr.bf16.mxu0 0
        %1085 = vmatpush1.bf16.msra.mxu0 %v892
        %1086 = vmatprep.subr.bf16.mxu0 0
        %1087 = vmatpush1.bf16.msra.mxu0 %v891
        %1088 = vmatprep.subr.bf16.mxu0 0
        %1089 = vmatpush1.bf16.msra.mxu0 %v890
        %1090 = vmatprep.subr.bf16.mxu0 0
        %1091 = vmatpush1.bf16.msra.mxu0 %v889
        %1092 = vmatprep.subr.bf16.mxu0 0
        %1093 = vmatpush1.bf16.msra.mxu0 %v888
        %1094 = vmatprep.subr.bf16.mxu0 0
        %1095 = vmatpush1.bf16.msra.mxu0 %v887
        %1096 = vmatprep.subr.bf16.mxu0 0
        %1097 = vmatpush2.bf16.msra.mxu0 %v902
        %1098 = vmatprep.subr.bf16.mxu0 0
        %1099 = vmatpush2.bf16.msra.mxu0 %v901
        %1100 = vmatprep.subr.bf16.mxu0 0
        %1101 = vmatpush2.bf16.msra.mxu0 %v900
        %1102 = vmatprep.subr.bf16.mxu0 0
        %1103 = vmatpush2.bf16.msra.mxu0 %v899
        %1104 = vmatprep.subr.bf16.mxu0 0
        %1105 = vmatpush2.bf16.msra.mxu0 %v898
        %1106 = vmatprep.subr.bf16.mxu0 0
        %1107 = vmatpush2.bf16.msra.mxu0 %v897
        %1108 = vmatprep.subr.bf16.mxu0 0
        %1109 = vmatpush2.bf16.msra.mxu0 %v896
        %1110 = vmatprep.subr.bf16.mxu0 0
        %1111 = vmatpush2.bf16.msra.mxu0 %v895
        %1112 = vmatprep.mubr.bf16.mxu0 %v514
        %1113 = vmatmul.mubr.bf16.gmra.mxu0 %v513
        %v1114 = vpop.f32.mrf.mxu0
        %v1115 = vadd.f32 %v1050, %v1114
        %v1116 = vpop.f32.mrf.mxu0
        %v1117 = vpop.f32.mrf.mxu0
        %v1118 = vadd.f32 %v1053, %v1117
        %v1119 = vpop.f32.mrf.mxu0
        %1120 = vmatprep.mubr.bf16.mxu0 %v523
        %1121 = vmatmul.mubr.bf16.gmra.mxu0 %v522
        %v1122 = vpop.f32.mrf.mxu0
        %v1123 = vadd.f32 %v1058, %v1122
        %v1124 = vpop.f32.mrf.mxu0
        %v1125 = vpop.f32.mrf.mxu0
        %v1126 = vadd.f32 %v1061, %v1125
        %v1127 = vpop.f32.mrf.mxu0
        %1128 = vmatprep.mubr.bf16.mxu0 %v532
        %1129 = vmatmul.mubr.bf16.gmra.mxu0 %v531
        %v1130 = vpop.f32.mrf.mxu0
        %v1131 = vadd.f32 %v1066, %v1130
        %v1132 = vpop.f32.mrf.mxu0
        %v1133 = vpop.f32.mrf.mxu0
        %v1134 = vadd.f32 %v1069, %v1133
        %v1135 = vpop.f32.mrf.mxu0
        %1136 = vmatprep.mubr.bf16.mxu0 %v541
        %1137 = vmatmul.mubr.bf16.gmra.mxu0 %v540
        %v1138 = vpop.f32.mrf.mxu0
        %v1139 = vadd.f32 %v1074, %v1138
        %v1140 = vpop.f32.mrf.mxu0
        %v1141 = vpop.f32.mrf.mxu0
        %v1142 = vadd.f32 %v1077, %v1141
        %v1143 = vpop.f32.mrf.mxu0
        %1144 = vdwg.mxu0
        %1145 = vmatprep.subr.bf16.mxu0 0
        %1146 = vmatpush1.bf16.msra.mxu0 %v910
        %1147 = vmatprep.subr.bf16.mxu0 0
        %1148 = vmatpush1.bf16.msra.mxu0 %v909
        %1149 = vmatprep.subr.bf16.mxu0 0
        %1150 = vmatpush1.bf16.msra.mxu0 %v908
        %1151 = vmatprep.subr.bf16.mxu0 0
        %1152 = vmatpush1.bf16.msra.mxu0 %v907
        %1153 = vmatprep.subr.bf16.mxu0 0
        %1154 = vmatpush1.bf16.msra.mxu0 %v906
        %1155 = vmatprep.subr.bf16.mxu0 0
        %1156 = vmatpush1.bf16.msra.mxu0 %v905
        %1157 = vmatprep.subr.bf16.mxu0 0
        %1158 = vmatpush1.bf16.msra.mxu0 %v904
        %1159 = vmatprep.subr.bf16.mxu0 0
        %1160 = vmatpush1.bf16.msra.mxu0 %v903
        %1161 = vmatprep.subr.bf16.mxu0 0
        %1162 = vmatpush2.bf16.msra.mxu0 %v918
        %1163 = vmatprep.subr.bf16.mxu0 0
        %1164 = vmatpush2.bf16.msra.mxu0 %v917
        %1165 = vmatprep.subr.bf16.mxu0 0
        %1166 = vmatpush2.bf16.msra.mxu0 %v916
        %1167 = vmatprep.subr.bf16.mxu0 0
        %1168 = vmatpush2.bf16.msra.mxu0 %v915
        %1169 = vmatprep.subr.bf16.mxu0 0
        %1170 = vmatpush2.bf16.msra.mxu0 %v914
        %1171 = vmatprep.subr.bf16.mxu0 0
        %1172 = vmatpush2.bf16.msra.mxu0 %v913
        %1173 = vmatprep.subr.bf16.mxu0 0
        %1174 = vmatpush2.bf16.msra.mxu0 %v912
        %1175 = vmatprep.subr.bf16.mxu0 0
        %1176 = vmatpush2.bf16.msra.mxu0 %v911
        %1177 = vmatprep.mubr.bf16.mxu0 %v516
        %1178 = vmatmul.mubr.bf16.gmra.mxu0 %v515
        %v1179 = vpop.f32.mrf.mxu0
        %v1180 = vadd.f32 %v1115, %v1179
        %v1181 = vpop.f32.mrf.mxu0
        %v1182 = vpop.f32.mrf.mxu0
        %v1183 = vadd.f32 %v1118, %v1182
        %v1184 = vpop.f32.mrf.mxu0
        %1185 = vmatprep.mubr.bf16.mxu0 %v525
        %1186 = vmatmul.mubr.bf16.gmra.mxu0 %v524
        %v1187 = vpop.f32.mrf.mxu0
        %v1188 = vadd.f32 %v1123, %v1187
        %v1189 = vpop.f32.mrf.mxu0
        %v1190 = vpop.f32.mrf.mxu0
        %v1191 = vadd.f32 %v1126, %v1190
        %v1192 = vpop.f32.mrf.mxu0
        %1193 = vmatprep.mubr.bf16.mxu0 %v534
        %1194 = vmatmul.mubr.bf16.gmra.mxu0 %v533
        %v1195 = vpop.f32.mrf.mxu0
        %v1196 = vadd.f32 %v1131, %v1195
        %v1197 = vpop.f32.mrf.mxu0
        %v1198 = vpop.f32.mrf.mxu0
        %v1199 = vadd.f32 %v1134, %v1198
        %v1200 = vpop.f32.mrf.mxu0
        %1201 = vmatprep.mubr.bf16.mxu0 %v543
        %1202 = vmatmul.mubr.bf16.gmra.mxu0 %v542
        %v1203 = vpop.f32.mrf.mxu0
        %v1204 = vadd.f32 %v1139, %v1203
        %v1205 = vpop.f32.mrf.mxu0
        %v1206 = vpop.f32.mrf.mxu0
        %v1207 = vadd.f32 %v1142, %v1206
        %v1208 = vpop.f32.mrf.mxu0
        %1209 = vdwg.mxu0
        %1210 = vmatprep.subr.bf16.mxu0 0
        %1211 = vmatpush1.bf16.msra.mxu0 %v926
        %1212 = vmatprep.subr.bf16.mxu0 0
        %1213 = vmatpush1.bf16.msra.mxu0 %v925
        %1214 = vmatprep.subr.bf16.mxu0 0
        %1215 = vmatpush1.bf16.msra.mxu0 %v924
        %1216 = vmatprep.subr.bf16.mxu0 0
        %1217 = vmatpush1.bf16.msra.mxu0 %v923
        %1218 = vmatprep.subr.bf16.mxu0 0
        %1219 = vmatpush1.bf16.msra.mxu0 %v922
        %1220 = vmatprep.subr.bf16.mxu0 0
        %1221 = vmatpush1.bf16.msra.mxu0 %v921
        %1222 = vmatprep.subr.bf16.mxu0 0
        %1223 = vmatpush1.bf16.msra.mxu0 %v920
        %1224 = vmatprep.subr.bf16.mxu0 0
        %1225 = vmatpush1.bf16.msra.mxu0 %v919
        %1226 = vmatprep.subr.bf16.mxu0 0
        %1227 = vmatpush2.bf16.msra.mxu0 %v934
        %1228 = vmatprep.subr.bf16.mxu0 0
        %1229 = vmatpush2.bf16.msra.mxu0 %v933
        %1230 = vmatprep.subr.bf16.mxu0 0
        %1231 = vmatpush2.bf16.msra.mxu0 %v932
        %1232 = vmatprep.subr.bf16.mxu0 0
        %1233 = vmatpush2.bf16.msra.mxu0 %v931
        %1234 = vmatprep.subr.bf16.mxu0 0
        %1235 = vmatpush2.bf16.msra.mxu0 %v930
        %1236 = vmatprep.subr.bf16.mxu0 0
        %1237 = vmatpush2.bf16.msra.mxu0 %v929
        %1238 = vmatprep.subr.bf16.mxu0 0
        %1239 = vmatpush2.bf16.msra.mxu0 %v928
        %1240 = vmatprep.subr.bf16.mxu0 0
        %1241 = vmatpush2.bf16.msra.mxu0 %v927
        %1242 = vmatprep.mubr.bf16.mxu0 %v518
        %1243 = vmatmul.mubr.bf16.gmra.mxu0 %v517
        %v1244 = vpop.f32.mrf.mxu0
        %v1245 = vadd.f32 %v1180, %v1244
        %v1246 = vpop.f32.mrf.mxu0
        %v1247 = vpop.f32.mrf.mxu0
        %v1248 = vadd.f32 %v1183, %v1247
        %v1249 = vpop.f32.mrf.mxu0
        %1250 = vmatprep.mubr.bf16.mxu0 %v527
        %1251 = vmatmul.mubr.bf16.gmra.mxu0 %v526
        %v1252 = vpop.f32.mrf.mxu0
        %v1253 = vadd.f32 %v1188, %v1252
        %v1254 = vpop.f32.mrf.mxu0
        %v1255 = vpop.f32.mrf.mxu0
        %v1256 = vadd.f32 %v1191, %v1255
        %v1257 = vpop.f32.mrf.mxu0
        %1258 = vmatprep.mubr.bf16.mxu0 %v536
        %1259 = vmatmul.mubr.bf16.gmra.mxu0 %v535
        %v1260 = vpop.f32.mrf.mxu0
        %v1261 = vadd.f32 %v1196, %v1260
        %v1262 = vpop.f32.mrf.mxu0
        %v1263 = vpop.f32.mrf.mxu0
        %v1264 = vadd.f32 %v1199, %v1263
        %v1265 = vpop.f32.mrf.mxu0
        %1266 = vmatprep.mubr.bf16.mxu0 %v545
        %1267 = vmatmul.mubr.bf16.gmra.mxu0 %v544
        %v1268 = vpop.f32.mrf.mxu0
        %v1269 = vadd.f32 %v1204, %v1268
        %v1270 = vpop.f32.mrf.mxu0
        %v1271 = vpop.f32.mrf.mxu0
        %v1272 = vadd.f32 %v1207, %v1271
        %v1273 = vpop.f32.mrf.mxu0
        %1274 = vdwg.mxu0
        %1275 = vmatprep.subr.bf16.mxu0 0
        %1276 = vmatpush1.bf16.msra.mxu0 %v942
        %1277 = vmatprep.subr.bf16.mxu0 0
        %1278 = vmatpush1.bf16.msra.mxu0 %v941
        %1279 = vmatprep.subr.bf16.mxu0 0
        %1280 = vmatpush1.bf16.msra.mxu0 %v940
        %1281 = vmatprep.subr.bf16.mxu0 0
        %1282 = vmatpush1.bf16.msra.mxu0 %v939
        %1283 = vmatprep.subr.bf16.mxu0 0
        %1284 = vmatpush1.bf16.msra.mxu0 %v938
        %1285 = vmatprep.subr.bf16.mxu0 0
        %1286 = vmatpush1.bf16.msra.mxu0 %v937
        %1287 = vmatprep.subr.bf16.mxu0 0
        %1288 = vmatpush1.bf16.msra.mxu0 %v936
        %1289 = vmatprep.subr.bf16.mxu0 0
        %1290 = vmatpush1.bf16.msra.mxu0 %v935
        %1291 = vmatprep.subr.bf16.mxu0 0
        %1292 = vmatpush2.bf16.msra.mxu0 0
        %1293 = vmatprep.subr.bf16.mxu0 0
        %1294 = vmatpush2.bf16.msra.mxu0 0
        %1295 = vmatprep.subr.bf16.mxu0 0
        %1296 = vmatpush2.bf16.msra.mxu0 0
        %1297 = vmatprep.subr.bf16.mxu0 0
        %1298 = vmatpush2.bf16.msra.mxu0 0
        %1299 = vmatprep.subr.bf16.mxu0 0
        %1300 = vmatpush2.bf16.msra.mxu0 0
        %1301 = vmatprep.subr.bf16.mxu0 0
        %1302 = vmatpush2.bf16.msra.mxu0 0
        %1303 = vmatprep.subr.bf16.mxu0 0
        %1304 = vmatpush2.bf16.msra.mxu0 0
        %1305 = vmatprep.subr.bf16.mxu0 0
        %1306 = vmatpush2.bf16.msra.mxu0 0
        %1307 = vmatprep.mubr.bf16.mxu0 0
        %1308 = vmatmul.mubr.bf16.gmra.mxu0 %v519
        %v1309 = vpop.f32.mrf.mxu0
        %v1310 = vadd.f32 %v1245, %v1309
        %v1311 = vpop.f32.mrf.mxu0
        %v1312 = vpop.f32.mrf.mxu0
        %v1313 = vadd.f32 %v1248, %v1312
        %v1314 = vpop.f32.mrf.mxu0
        %1315 = vmatprep.mubr.bf16.mxu0 0
        %1316 = vmatmul.mubr.bf16.gmra.mxu0 %v528
        %v1317 = vpop.f32.mrf.mxu0
        %v1318 = vadd.f32 %v1253, %v1317
        %v1319 = vpop.f32.mrf.mxu0
        %v1320 = vpop.f32.mrf.mxu0
        %v1321 = vadd.f32 %v1256, %v1320
        %v1322 = vpop.f32.mrf.mxu0
        %1323 = vmatprep.mubr.bf16.mxu0 0
        %1324 = vmatmul.mubr.bf16.gmra.mxu0 %v537
        %v1325 = vpop.f32.mrf.mxu0
        %v1326 = vadd.f32 %v1261, %v1325
        %v1327 = vpop.f32.mrf.mxu0
        %v1328 = vpop.f32.mrf.mxu0
        %v1329 = vadd.f32 %v1264, %v1328
        %v1330 = vpop.f32.mrf.mxu0
        %1331 = vmatprep.mubr.bf16.mxu0 0
        %1332 = vmatmul.mubr.bf16.gmra.mxu0 %v546
        %v1333 = vpop.f32.mrf.mxu0
        %v1334 = vadd.f32 %v1269, %v1333
        %v1335 = vpop.f32.mrf.mxu0
        %v1336 = vpop.f32.mrf.mxu0
        %v1337 = vadd.f32 %v1272, %v1336
        %v1338 = vpop.f32.mrf.mxu0
        %1339 = vdwg.mxu0
        %1340 = vst [vmem:[%s204] sm:$0xff] %v1310
        %1341 = vst [vmem:[%s204 + $0x8] sm:$0xff] %v1313
        %1342 = vst [vmem:[%s204 + $0x10] sm:$0xff] %v1318
        %1343 = vst [vmem:[%s204 + $0x18] sm:$0xff] %v1321
        %1344 = vst [vmem:[%s204 + $0x20] sm:$0xff] %v1326
        %1345 = vst [vmem:[%s204 + $0x28] sm:$0xff] %v1329
        %1346 = vst [vmem:[%s204 + $0x30] sm:$0xff] %v1334
        %1347 = vst [vmem:[%s204 + $0x38] sm:$0xff] %v1337
        %s1348 = sand.u32 %s97, 1
        %s1349 = scalar_lea.sflag [#allocation4], %s1348
        %s1350 = sand.u32 %s97, 1
        %s1351 = smul.addr %s1350, 64
        %s1352 = scalar_lea.vmem [#allocation7], %s1351
        // Predicated region
        $region41: #{tpu_custom_call.1} parent=31 // pred_check
          %p1353 = pneg %p107
        $region42: #{tpu_custom_call.1} parent=31 // pred_check_branch
          %1355 = sbr.rel (%p1353) target = $region44
        $region43: #{tpu_custom_call.1} parent=31 // pred_region
          %s1356 = smul.u32 8, %s21
          %s1358 = ssub.s32 1024, 1024
          %1359 = vsyncadd %s1349, %s1358
          %s1360 = smul.addr %s1356, 128
          %s1361 = scalar_lea.hbm %s3, %s1360
          %s1362 = sshll.u32 %s1352, 4
          %s1363 = int_to_ptr.vmem [resolvable:$true] %s1362
          %1368 = dma.vmem_to_hbm [thread:$0]  %s1363, 1024, %s1361, %s1349, 128, 128, 8
        $region44: #{tpu_custom_call.1} parent=31 // pred_fallthru
          _
      $region32: #{tpu_custom_call.1} parent=5 // pred_fallthru
        _
      %p1369 = scmp.le.s32.totalorder 2, %s16
      // Predicated region
      $region45: #{tpu_custom_call.1} parent=5 // pred_check
        %p1370 = pneg %p1369
      $region46: #{tpu_custom_call.1} parent=5 // pred_check_branch
        %1372 = sbr.rel (%p1370) target = $region48
      $region47: #{tpu_custom_call.1} parent=5 // pred_region
        %s1373 = ssub.s32 %s16, 2
        // Predicated region
        $region49: #{tpu_custom_call.1} parent=47 // pred_check
          %p1374 = pneg %p113
        $region50: #{tpu_custom_call.1} parent=47 // pred_check_branch
          %1376 = sbr.rel (%p1374) target = $region52
        $region51: #{tpu_custom_call.1} parent=47 // pred_region
          %s1377 = sand.u32 %s98, 1
          %s1378 = scalar_lea.sflag [#allocation4], %s1377
          %s1379 = sand.u32 %s98, 1
          %s1380 = smul.addr %s1379, 64
          %s1381 = scalar_lea.vmem [#allocation7], %s1380
          %1382 = dma.done %s1378, 1024
        $region52: #{tpu_custom_call.1} parent=47 // pred_fallthru
          _
      $region48: #{tpu_custom_call.1} parent=5 // pred_fallthru
        _
    $region6: #{tpu_custom_call.1} parent=1 // loop_footer
      %s20 = sadd.s32 1, %s16
    $region7: #{tpu_custom_call.1} parent=1 // loop_footer_branch
      %15 = sbr.rel target = $region3
    $region8: #{tpu_custom_call.1} parent=1 // loop_exit
      _
    %1383 = vsyncpa [#allocation3], 1
    %s1384 = scalar_lea.sflag [#allocation3], 1
    %1385 = vsyncpa %s1384, 1
    %1386 = vsyncpa [#allocation6], 1
    %1387 = vsyncpa [#allocation4], 1
    %s1388 = scalar_lea.sflag [#allocation4], 1
    %1389 = vsyncpa %s1388, 1

</llo_original>
